<compile_context>
chip_gen: v5e
topology: v5e:2x2
jax: 0.10.0
libtpu: 0.0.40
codegen_flags: <defaults>
</compile_context>

<pallas_src>
import jax
import jax.numpy as jnp
from jax.experimental import pallas as pl
from jax.experimental.pallas import tpu as pltpu


IN_FEATURES = 42          # 21 keypoints x 2 coords, flattened
LANE = 128                # padded feature width (lane dimension)
OUT_LANES = 8             # padded output width (7 valid + 1 zero lane)
MAX_TILE_B = 2048         # rows per grid step for large batches
_DIMS = [(42, 84), (84, 42), (42, 21), (21, 7)]


def _round_up(n, m):
    return ((n + m - 1) // m) * m


def _mlp_kernel(x_ref, w_ref, b_ref, o_ref):
    """x: (T, 42) f32; w: (512, 128) compute-dtype slab; b: (8, 128) f32."""
    cdt = w_ref.dtype
    x = x_ref[...].astype(cdt)                                       # (T, 42)

    # Layer 1: (T, 42) @ (42, 128); cols 84:128 of W1/b1 are zero.
    h = jnp.dot(x, w_ref[0:42, :], preferred_element_type=jnp.float32)
    h = jnp.maximum(h + b_ref[0:1, :], 0.0)                          # (T, 128) f32

    # Layer 2: (T, 128) @ (128, 128); rows 84: and cols 42: of W2 are zero.
    h = jnp.dot(h.astype(cdt), w_ref[128:256, :],
                preferred_element_type=jnp.float32)
    h = jnp.maximum(h + b_ref[1:2, :], 0.0)

    # Layer 3.
    h = jnp.dot(h.astype(cdt), w_ref[256:384, :],
                preferred_element_type=jnp.float32)
    h = jnp.maximum(h + b_ref[2:3, :], 0.0)

    # Layer 4 (no final ReLU).  Cols 7:128 of W4/b4 are zero, so output
    # lane 7 is exactly zero; only lanes 0:8 are stored.
    h = jnp.dot(h.astype(cdt), w_ref[384:512, :],
                preferred_element_type=jnp.float32)
    h = h + b_ref[3:4, :]
    o_ref[...] = h[:, :OUT_LANES].astype(o_ref.dtype)                # (T, 8)


def pack_params(params, compute_dtype=jnp.bfloat16):
    """Pack weights into one zero-padded (512, 128) slab + (8, 128) f32 biases.

    Weight slab rows i*128 : i*128+d_in, cols 0:d_out hold W(i+1) (stored as
    (in, out), i.e. the transpose of nn.Linear's weight); everything else is 0.
    Bias slab row i, cols 0:d_out hold b(i+1); stays f32 (added to f32 acc).
    """
    wslab = jnp.zeros((4 * LANE, LANE), jnp.float32)
    bslab = jnp.zeros((8, LANE), jnp.float32)
    for i, (d_in, d_out) in enumerate(_DIMS):
        w = params[f"w{i + 1}"].astype(jnp.float32)                  # (d_in, d_out)
        bias = params[f"b{i + 1}"].reshape(d_out).astype(jnp.float32)
        wslab = wslab.at[i * LANE:i * LANE + d_in, :d_out].set(w)
        bslab = bslab.at[i, :d_out].set(bias)
    return wslab.astype(compute_dtype), bslab


def hand_pos_model_forward(z, params, *, compute_dtype=jnp.bfloat16):
    """z: (B, *) flattenable to (B, 42). params: dict of weights/biases."""
    b = z.shape[0]
    x = z.reshape(b, -1).astype(jnp.float32)
    assert x.shape[1] == IN_FEATURES, \
        f"expected {IN_FEATURES} flattened features, got {x.shape[1]}"

    wslab, bslab = pack_params(params, compute_dtype)

    # Adaptive tile: exact (rounded to 8) single tile for small batches,
    # 2048-row tiles for large batches (keeps >=2 tiles for v7x megacore).
    b_r8 = _round_up(b, 8)
    tile_b = min(MAX_TILE_B, b_r8)
    n_tiles = pl.cdiv(b_r8, tile_b)
    b_pad = n_tiles * tile_b
    if b_pad != b:
        # Padded rows are independent garbage-free zeros, sliced away below.
        x = jnp.pad(x, ((0, b_pad - b), (0, 0)))

    flops = 2 * b_pad * sum(di * do for di, do in _DIMS)
    bytes_accessed = (b_pad * IN_FEATURES * 4            # input read (f32)
                      + b_pad * OUT_LANES * 4            # output write (f32)
                      + wslab.size * wslab.dtype.itemsize
                      + bslab.size * 4)

    out = pl.pallas_call(
        _mlp_kernel,
        out_shape=jax.ShapeDtypeStruct((b_pad, OUT_LANES), jnp.float32),
        grid_spec=pltpu.PrefetchScalarGridSpec(
            num_scalar_prefetch=0,
            grid=(n_tiles,),
            in_specs=[
                pl.BlockSpec((tile_b, IN_FEATURES), lambda i: (i, 0)),  # batch tile
                pl.BlockSpec((4 * LANE, LANE), lambda i: (0, 0)),       # resident W
                pl.BlockSpec((8, LANE), lambda i: (0, 0)),              # resident b
            ],
            out_specs=pl.BlockSpec((tile_b, OUT_LANES), lambda i: (i, 0)),
        ),
        compiler_params=pltpu.CompilerParams(
            dimension_semantics=("parallel",)),
        cost_estimate=pl.CostEstimate(
            flops=flops, transcendentals=0, bytes_accessed=bytes_accessed),
    )(x, wslab, bslab)

    return out[:b, :7]


def init_params(key):
    """Deterministic synthetic parameters matching nn.Linear shapes.

    PyTorch nn.Linear(in, out) has weight (out, in); we store the transpose
    (in, out) so the kernel computes x @ W directly.
    """
    params = {}
    keys = jax.random.split(key, 2 * len(_DIMS))
    for i, (d_in, d_out) in enumerate(_DIMS):
        bound = 1.0 / jnp.sqrt(d_in)
        w = jax.random.uniform(keys[2 * i], (d_in, d_out),
                               minval=-bound, maxval=bound, dtype=jnp.float32)
        bias = jax.random.uniform(keys[2 * i + 1], (1, d_out),
                                  minval=-bound, maxval=bound, dtype=jnp.float32)
        params[f"w{i + 1}"] = w
        params[f"b{i + 1}"] = bias
    return params


def _reference_forward(z, params):
    x = z.reshape(z.shape[0], -1).astype(jnp.float32)
    h = jnp.maximum(x @ params["w1"] + params["b1"], 0.0)
    h = jnp.maximum(h @ params["w2"] + params["b2"], 0.0)
    h = jnp.maximum(h @ params["w3"] + params["b3"], 0.0)
    return h @ params["w4"] + params["b4"]


def _reference_forward_bf16(z, params):
    """Emulates the kernel's bf16-weight / bf16-activation / f32-acc math."""
    h = z.reshape(z.shape[0], -1).astype(jnp.bfloat16)
    for i in range(1, 5):
        w = params[f"w{i}"].astype(jnp.bfloat16)
        b = params[f"b{i}"].astype(jnp.float32)
        h = jnp.dot(h, w, preferred_element_type=jnp.float32) + b
        if i < 4:
            h = jnp.maximum(h, 0.0).astype(jnp.bfloat16)
    return h


if __name__ == "__main__":
    key = jax.random.PRNGKey(0)
    k_params, k_input = jax.random.split(key)

    params = init_params(k_params)

    # Hand pose input: batch of 8, 21 keypoints x 2 coords = 42 features.
    batch = 8
    z = jax.random.normal(k_input, (batch, 21, 2), dtype=jnp.float32)

    # f32 path: tight parity with the f32 reference.
    out_f32 = jax.block_until_ready(
        hand_pos_model_forward(z, params, compute_dtype=jnp.float32))
    ref_f32 = _reference_forward(z, params)
    assert out_f32.shape == (batch, 7), out_f32.shape
    assert jnp.allclose(out_f32, ref_f32, atol=1e-5, rtol=1e-5), \
        "f32 kernel mismatch vs f32 reference"

    # bf16 path (default, fast): tight parity with a bf16-emulated reference,
    # loose parity with the f32 reference.
    out_bf16 = jax.block_until_ready(hand_pos_model_forward(z, params))
    ref_bf16 = _reference_forward_bf16(z, params)
    assert out_bf16.shape == (batch, 7), out_bf16.shape
    assert jnp.allclose(out_bf16, ref_bf16, atol=2e-3, rtol=2e-3), \
        "bf16 kernel mismatch vs bf16-emulated reference"
    assert jnp.allclose(out_bf16, ref_f32, atol=5e-2, rtol=5e-2), \
        "bf16 kernel too far from f32 reference"

    print("KERNEL_OK")
</pallas_src>

<mosaic_0001>
module attributes {stable_mosaic.version = 11 : i64} {
  func.func @_mlp_kernel(%arg0: i32, %arg1: memref<8x42xf32, #tpu.memory_space<vmem>>, %arg2: memref<512x128xf32, #tpu.memory_space<vmem>>, %arg3: memref<8x128xf32, #tpu.memory_space<vmem>>, %arg4: memref<8x8xf32, #tpu.memory_space<vmem>>) attributes {dimension_semantics = [#tpu.dimension_semantics<parallel>], iteration_bounds = array<i64: 1>, scalar_prefetch = 0 : i64, scratch_operands = 0 : i64, tpu.core_type = #tpu.core_type<tc>, window_params = [{transform_indices = @transform_0, window_bounds = array<i64: 8, 42>}, {pipeline_mode = #tpu.pipeline_mode<synchronous>, transform_indices = @transform_1, window_bounds = array<i64: 512, 128>}, {pipeline_mode = #tpu.pipeline_mode<synchronous>, transform_indices = @transform_2, window_bounds = array<i64: 8, 128>}, {transform_indices = @transform_3, window_bounds = array<i64: 8, 8>}]} {
    %c0 = arith.constant 0 : index
    %c0_0 = arith.constant 0 : index
    %0 = vector.load %arg1[%c0, %c0_0] : memref<8x42xf32, #tpu.memory_space<vmem>>, vector<8x42xf32>
    %c0_1 = arith.constant 0 : index
    %c0_2 = arith.constant 0 : index
    %1 = vector.load %arg2[%c0_1, %c0_2] : memref<512x128xf32, #tpu.memory_space<vmem>>, vector<42x128xf32>
    %cst = arith.constant dense<0.000000e+00> : vector<8x128xf32>
    %2 = tpu.matmul %0, %1, %cst {dimension_numbers = #tpu.dot_dimension_numbers<[1], [0], [0], [1], [0, 0, 1, 1], [], []>} : vector<8x42xf32>, vector<42x128xf32>, vector<8x128xf32> -> vector<8x128xf32>
    %c0_3 = arith.constant 0 : index
    %c0_4 = arith.constant 0 : index
    %3 = vector.load %arg3[%c0_3, %c0_4] : memref<8x128xf32, #tpu.memory_space<vmem>>, vector<1x128xf32>
    %4 = vector.broadcast %3 : vector<1x128xf32> to vector<8x128xf32>
    %5 = arith.addf %2, %4 : vector<8x128xf32>
    %cst_5 = arith.constant 0.000000e+00 : f32
    %6 = vector.broadcast %cst_5 : f32 to vector<8x128xf32>
    %7 = arith.maximumf %5, %6 : vector<8x128xf32>
    %c128 = arith.constant 128 : index
    %c0_6 = arith.constant 0 : index
    %8 = vector.load %arg2[%c128, %c0_6] : memref<512x128xf32, #tpu.memory_space<vmem>>, vector<128x128xf32>
    %cst_7 = arith.constant dense<0.000000e+00> : vector<8x128xf32>
    %9 = tpu.matmul %7, %8, %cst_7 {dimension_numbers = #tpu.dot_dimension_numbers<[1], [0], [0], [1], [0, 0, 1, 1], [], []>} : vector<8x128xf32>, vector<128x128xf32>, vector<8x128xf32> -> vector<8x128xf32>
    %c1 = arith.constant 1 : index
    %c0_8 = arith.constant 0 : index
    %10 = vector.load %arg3[%c1, %c0_8] : memref<8x128xf32, #tpu.memory_space<vmem>>, vector<1x128xf32>
    %11 = vector.broadcast %10 : vector<1x128xf32> to vector<8x128xf32>
    %12 = arith.addf %9, %11 : vector<8x128xf32>
    %cst_9 = arith.constant 0.000000e+00 : f32
    %13 = vector.broadcast %cst_9 : f32 to vector<8x128xf32>
    %14 = arith.maximumf %12, %13 : vector<8x128xf32>
    %c256 = arith.constant 256 : index
    %c0_10 = arith.constant 0 : index
    %15 = vector.load %arg2[%c256, %c0_10] : memref<512x128xf32, #tpu.memory_space<vmem>>, vector<128x128xf32>
    %cst_11 = arith.constant dense<0.000000e+00> : vector<8x128xf32>
    %16 = tpu.matmul %14, %15, %cst_11 {dimension_numbers = #tpu.dot_dimension_numbers<[1], [0], [0], [1], [0, 0, 1, 1], [], []>} : vector<8x128xf32>, vector<128x128xf32>, vector<8x128xf32> -> vector<8x128xf32>
    %c2 = arith.constant 2 : index
    %c0_12 = arith.constant 0 : index
    %17 = vector.load %arg3[%c2, %c0_12] : memref<8x128xf32, #tpu.memory_space<vmem>>, vector<1x128xf32>
    %18 = vector.broadcast %17 : vector<1x128xf32> to vector<8x128xf32>
    %19 = arith.addf %16, %18 : vector<8x128xf32>
    %cst_13 = arith.constant 0.000000e+00 : f32
    %20 = vector.broadcast %cst_13 : f32 to vector<8x128xf32>
    %21 = arith.maximumf %19, %20 : vector<8x128xf32>
    %c384 = arith.constant 384 : index
    %c0_14 = arith.constant 0 : index
    %22 = vector.load %arg2[%c384, %c0_14] : memref<512x128xf32, #tpu.memory_space<vmem>>, vector<128x128xf32>
    %cst_15 = arith.constant dense<0.000000e+00> : vector<8x128xf32>
    %23 = tpu.matmul %21, %22, %cst_15 {dimension_numbers = #tpu.dot_dimension_numbers<[1], [0], [0], [1], [0, 0, 1, 1], [], []>} : vector<8x128xf32>, vector<128x128xf32>, vector<8x128xf32> -> vector<8x128xf32>
    %c3 = arith.constant 3 : index
    %c0_16 = arith.constant 0 : index
    %24 = vector.load %arg3[%c3, %c0_16] : memref<8x128xf32, #tpu.memory_space<vmem>>, vector<1x128xf32>
    %25 = vector.broadcast %24 : vector<1x128xf32> to vector<8x128xf32>
    %26 = arith.addf %23, %25 : vector<8x128xf32>
    %27 = vector.extract_strided_slice %26 {offsets = [0, 0], sizes = [8, 8], strides = [1, 1]} : vector<8x128xf32> to vector<8x8xf32>
    %c0_17 = arith.constant 0 : index
    %c0_18 = arith.constant 0 : index
    %28 = vector.load %arg4[%c0_17, %c0_18] : memref<8x8xf32, #tpu.memory_space<vmem>>, vector<8x8xf32>
    tpu.vector_store %arg4[%c0_17, %c0_18], %27 {strides = array<i32>} : memref<8x8xf32, #tpu.memory_space<vmem>>, vector<8x8xf32>,
    return
  }
  func.func @transform_0(%arg0: i32) -> (i32, i32) {
    %c0_i32 = arith.constant 0 : i32
    %c0_i32_0 = arith.constant 0 : i32
    return %arg0, %c0_i32 : i32, i32
  }
  func.func @transform_1(%arg0: i32) -> (i32, i32) {
    %c0_i32 = arith.constant 0 : i32
    %c0_i32_0 = arith.constant 0 : i32
    %c0_i32_1 = arith.constant 0 : i32
    return %c0_i32, %c0_i32_0 : i32, i32
  }
  func.func @transform_2(%arg0: i32) -> (i32, i32) {
    %c0_i32 = arith.constant 0 : i32
    %c0_i32_0 = arith.constant 0 : i32
    %c0_i32_1 = arith.constant 0 : i32
    return %c0_i32, %c0_i32_0 : i32, i32
  }
  func.func @transform_3(%arg0: i32) -> (i32, i32) {
    %c0_i32 = arith.constant 0 : i32
    %c0_i32_0 = arith.constant 0 : i32
    return %arg0, %c0_i32 : i32, i32
  }
}

</mosaic_0001>

<llo_original>
// kernel: tpu_custom_call.1
$region0: #{tpu_custom_call.1}
  #allocation0 [shape = 'u32[]', space=smem, size = 0x4, offset = 0x4, fixed_abs, tag = 'smem constant byte address 0x4 - core index']
  #allocation1 [shape = 'u32[72,128]{1,0:T(1,128)}', space=vmem, size = 0x9000, scoped, tag = 'internal scratch']
  %s0 = inlined_call_operand.hbm [shape: f32[8,42], index: 0, kind: input, shape index: {}]
  %s1 = inlined_call_operand.hbm [shape: f32[512,128], index: 1, kind: input, shape index: {}]
  %s2 = inlined_call_operand.hbm [shape: f32[8,128], index: 2, kind: input, shape index: {}]
  %s3 = inlined_call_operand.hbm [shape: f32[8,8], index: 3, kind: output, shape index: {}]
  %s4 = sld [smem:[#allocation0]]
  $region34: #{tpu_custom_call.1} parent=0
    _
  %s6 = ssub.s32 1, %s4
  %s7 = scalar_select 0, %s6, %s4
  $region1: #{tpu_custom_call.1} parent=0
    #allocation2 [shape = 'u8[4096]{0}', space=vmem, size = 0x1000, scoped, tag = 'input window, operand 0, single buffered']
    #allocation3 [shape = 's32[1]{0}', space=sflag, size = 0x4, scoped, tag = 'scoped memory for tpu_custom_call.1']
    #allocation4 [shape = 's32[1]{0}', space=sflag, size = 0x4, scoped, tag = 'scoped memory for tpu_custom_call.1']
    #allocation5 [shape = 'u8[262144]{0}', space=vmem, size = 0x40000, scoped, tag = 'input window, operand 1, single buffered']
    #allocation6 [shape = 's32[1]{0}', space=sflag, size = 0x4, scoped, tag = 'scoped memory for tpu_custom_call.1']
    #allocation7 [shape = 'u8[4096]{0}', space=vmem, size = 0x1000, scoped, tag = 'input window, operand 2, single buffered']
    #allocation8 [shape = 'u8[4096]{0}', space=vmem, size = 0x1000, scoped, tag = 'output window, operand 0, single buffered']
    %8 = vsyncpa [#allocation3], 0
    %9 = vsyncpa [#allocation6], 0
    %10 = vsyncpa [#allocation4], 0
    // Predicated region
    $region2: #{tpu_custom_call.1} parent=1 // pred_check
      _
    $region3: #{tpu_custom_call.1} parent=1 // pred_check_branch
      %12 = sbr.rel (0) target = $region5
    $region4: #{tpu_custom_call.1} parent=1 // pred_region
      %14 = vsyncadd [#allocation3], 0
      %s16 = sshll.u32 %s0, 4
      %s17 = int_to_ptr.hbm [resolvable:$true] %s16
      %s18 = sshll.u32 [#allocation2], 4
      %s19 = int_to_ptr.vmem [resolvable:$true] %s18
      %21 = dma.hbm_to_vmem [thread:$0]  %s17, 128, %s19, [#allocation3]
    $region5: #{tpu_custom_call.1} parent=1 // pred_fallthru
      _
    // Predicated region
    $region6: #{tpu_custom_call.1} parent=1 // pred_check
      _
    $region7: #{tpu_custom_call.1} parent=1 // pred_check_branch
      %23 = sbr.rel (0) target = $region9
    $region8: #{tpu_custom_call.1} parent=1 // pred_region
      %25 = vsyncadd [#allocation6], 0
      %s26 = sshll.u32 %s1, 4
      %s27 = int_to_ptr.hbm [resolvable:$true] %s26
      %s28 = sshll.u32 [#allocation5], 4
      %s29 = int_to_ptr.vmem [resolvable:$true] %s28
      %34 = dma.hbm_to_vmem [thread:$0]  %s27, 8192, %s29, [#allocation6], 128, 128, 8
    $region9: #{tpu_custom_call.1} parent=1 // pred_fallthru
      _
    // Predicated region
    $region10: #{tpu_custom_call.1} parent=1 // pred_check
      _
    $region11: #{tpu_custom_call.1} parent=1 // pred_check_branch
      %36 = sbr.rel (0) target = $region13
    $region12: #{tpu_custom_call.1} parent=1 // pred_region
      %38 = vsyncadd [#allocation6], 0
      %s40 = sshll.u32 %s2, 4
      %s41 = int_to_ptr.hbm [resolvable:$true] %s40
      %s42 = sshll.u32 [#allocation7], 4
      %s43 = int_to_ptr.vmem [resolvable:$true] %s42
      %45 = dma.hbm_to_vmem [thread:$0]  %s41, 128, %s43, [#allocation6]
    $region13: #{tpu_custom_call.1} parent=1 // pred_fallthru
      _
    // Predicated region
    $region14: #{tpu_custom_call.1} parent=1 // pred_check
      _
    $region15: #{tpu_custom_call.1} parent=1 // pred_check_branch
      %47 = sbr.rel (0) target = $region17
    $region16: #{tpu_custom_call.1} parent=1 // pred_region
      %49 = dma.done [#allocation3], 128
    $region17: #{tpu_custom_call.1} parent=1 // pred_fallthru
      _
    // Predicated region
    $region18: #{tpu_custom_call.1} parent=1 // pred_check
      _
    $region19: #{tpu_custom_call.1} parent=1 // pred_check_branch
      %51 = sbr.rel (0) target = $region21
    $region20: #{tpu_custom_call.1} parent=1 // pred_region
      %53 = dma.done [#allocation6], 8192
    $region21: #{tpu_custom_call.1} parent=1 // pred_fallthru
      _
    // Predicated region
    $region22: #{tpu_custom_call.1} parent=1 // pred_check
      _
    $region23: #{tpu_custom_call.1} parent=1 // pred_check_branch
      %55 = sbr.rel (0) target = $region25
    $region24: #{tpu_custom_call.1} parent=1 // pred_region
      %57 = dma.done [#allocation6], 128
    $region25: #{tpu_custom_call.1} parent=1 // pred_fallthru
      _
    %v58 = vld [vmem:[#allocation2] sm:$0xff]
    %v59 = vld [vmem:[#allocation5] sm:$0xff]
    %v60 = vld [vmem:[#allocation5 + $0x8] sm:$0xff]
    %v61 = vld [vmem:[#allocation5 + $0x10] sm:$0xff]
    %v62 = vld [vmem:[#allocation5 + $0x18] sm:$0xff]
    %v63 = vld [vmem:[#allocation5 + $0x20] sm:$0xff]
    %v64 = vld [vmem:[#allocation5 + $0x28] sm:$0x3]
    %v65 = vld [vmem:[#allocation7] sm:$0x1]
    %v66 = vperm.slane %v65, 0
    %vm67 = vcmask 343040
    %v69 = vsel %vm67, %v58, 0
    %vm71 = vcmask 1041408
    %v73 = vsel %vm71, %v64, 0
    %75 = vmatpush.msra.mxu0 0.0
    %76 = vmatpush.msra.mxu0 0.0
    %77 = vmatpush.msra.mxu0 0.0
    %78 = vmatpush.msra.mxu0 0.0
    %79 = vmatpush.msra.mxu0 0.0
    %80 = vmatpush.msra.mxu0 0.0
    %81 = vmatpush.msra.mxu0 0.0
    %82 = vmatpush.msra.mxu0 0.0
    %83 = vmatpush.msra.mxu0 0.0
    %84 = vmatpush.msra.mxu0 0.0
    %85 = vmatpush.msra.mxu0 %v73
    %86 = vmatpush.msra.mxu0 %v63
    %87 = vmatpush.msra.mxu0 %v62
    %88 = vmatpush.msra.mxu0 %v61
    %89 = vmatpush.msra.mxu0 %v60
    %90 = vmatpush.msra.mxu0 %v59
    %91 = vmatmul.f32.gmra.mxu0 %v69
    %v92 = vpop.f32.mrf.mxu0
    %v93 = vadd.f32 %v66, %v92
    %94 = vdwg.mxu0
    %v95 = vmax.f32 %v93, 0.0
    %v96 = vld [vmem:[#allocation5 + $0x80] sm:$0xff]
    %v97 = vld [vmem:[#allocation5 + $0x88] sm:$0xff]
    %v98 = vld [vmem:[#allocation5 + $0x90] sm:$0xff]
    %v99 = vld [vmem:[#allocation5 + $0x98] sm:$0xff]
    %v100 = vld [vmem:[#allocation5 + $0xa0] sm:$0xff]
    %v101 = vld [vmem:[#allocation5 + $0xa8] sm:$0xff]
    %v102 = vld [vmem:[#allocation5 + $0xb0] sm:$0xff]
    %v103 = vld [vmem:[#allocation5 + $0xb8] sm:$0xff]
    %v104 = vld [vmem:[#allocation5 + $0xc0] sm:$0xff]
    %v105 = vld [vmem:[#allocation5 + $0xc8] sm:$0xff]
    %v106 = vld [vmem:[#allocation5 + $0xd0] sm:$0xff]
    %v107 = vld [vmem:[#allocation5 + $0xd8] sm:$0xff]
    %v108 = vld [vmem:[#allocation5 + $0xe0] sm:$0xff]
    %v109 = vld [vmem:[#allocation5 + $0xe8] sm:$0xff]
    %v110 = vld [vmem:[#allocation5 + $0xf0] sm:$0xff]
    %v111 = vld [vmem:[#allocation5 + $0xf8] sm:$0xff]
    %v112 = vld [vmem:[#allocation7 + $0x1] sm:$0x1]
    %v113 = vperm.slane %v112, 0
    %114 = vmatpush.msra.mxu0 %v111
    %115 = vmatpush.msra.mxu0 %v110
    %116 = vmatpush.msra.mxu0 %v109
    %117 = vmatpush.msra.mxu0 %v108
    %118 = vmatpush.msra.mxu0 %v107
    %119 = vmatpush.msra.mxu0 %v106
    %120 = vmatpush.msra.mxu0 %v105
    %121 = vmatpush.msra.mxu0 %v104
    %122 = vmatpush.msra.mxu0 %v103
    %123 = vmatpush.msra.mxu0 %v102
    %124 = vmatpush.msra.mxu0 %v101
    %125 = vmatpush.msra.mxu0 %v100
    %126 = vmatpush.msra.mxu0 %v99
    %127 = vmatpush.msra.mxu0 %v98
    %128 = vmatpush.msra.mxu0 %v97
    %129 = vmatpush.msra.mxu0 %v96
    %130 = vmatmul.f32.gmra.mxu0 %v95
    %v131 = vpop.f32.mrf.mxu0
    %v132 = vadd.f32 %v113, %v131
    %133 = vdwg.mxu0
    %v134 = vmax.f32 %v132, 0.0
    %v135 = vld [vmem:[#allocation5 + $0x100] sm:$0xff]
    %v136 = vld [vmem:[#allocation5 + $0x108] sm:$0xff]
    %v137 = vld [vmem:[#allocation5 + $0x110] sm:$0xff]
    %v138 = vld [vmem:[#allocation5 + $0x118] sm:$0xff]
    %v139 = vld [vmem:[#allocation5 + $0x120] sm:$0xff]
    %v140 = vld [vmem:[#allocation5 + $0x128] sm:$0xff]
    %v141 = vld [vmem:[#allocation5 + $0x130] sm:$0xff]
    %v142 = vld [vmem:[#allocation5 + $0x138] sm:$0xff]
    %v143 = vld [vmem:[#allocation5 + $0x140] sm:$0xff]
    %v144 = vld [vmem:[#allocation5 + $0x148] sm:$0xff]
    %v145 = vld [vmem:[#allocation5 + $0x150] sm:$0xff]
    %v146 = vld [vmem:[#allocation5 + $0x158] sm:$0xff]
    %v147 = vld [vmem:[#allocation5 + $0x160] sm:$0xff]
    %v148 = vld [vmem:[#allocation5 + $0x168] sm:$0xff]
    %v149 = vld [vmem:[#allocation5 + $0x170] sm:$0xff]
    %v150 = vld [vmem:[#allocation5 + $0x178] sm:$0xff]
    %v151 = vld [vmem:[#allocation7 + $0x2] sm:$0x1]
    %v152 = vperm.slane %v151, 0
    %153 = vmatpush.msra.mxu0 %v150
    %154 = vmatpush.msra.mxu0 %v149
    %155 = vmatpush.msra.mxu0 %v148
    %156 = vmatpush.msra.mxu0 %v147
    %157 = vmatpush.msra.mxu0 %v146
    %158 = vmatpush.msra.mxu0 %v145
    %159 = vmatpush.msra.mxu0 %v144
    %160 = vmatpush.msra.mxu0 %v143
    %161 = vmatpush.msra.mxu0 %v142
    %162 = vmatpush.msra.mxu0 %v141
    %163 = vmatpush.msra.mxu0 %v140
    %164 = vmatpush.msra.mxu0 %v139
    %165 = vmatpush.msra.mxu0 %v138
    %166 = vmatpush.msra.mxu0 %v137
    %167 = vmatpush.msra.mxu0 %v136
    %168 = vmatpush.msra.mxu0 %v135
    %169 = vmatmul.f32.gmra.mxu0 %v134
    %v170 = vpop.f32.mrf.mxu0
    %v171 = vadd.f32 %v152, %v170
    %172 = vdwg.mxu0
    %v173 = vmax.f32 %v171, 0.0
    %v174 = vld [vmem:[#allocation5 + $0x180] sm:$0xff]
    %v175 = vld [vmem:[#allocation5 + $0x188] sm:$0xff]
    %v176 = vld [vmem:[#allocation5 + $0x190] sm:$0xff]
    %v177 = vld [vmem:[#allocation5 + $0x198] sm:$0xff]
    %v178 = vld [vmem:[#allocation5 + $0x1a0] sm:$0xff]
    %v179 = vld [vmem:[#allocation5 + $0x1a8] sm:$0xff]
    %v180 = vld [vmem:[#allocation5 + $0x1b0] sm:$0xff]
    %v181 = vld [vmem:[#allocation5 + $0x1b8] sm:$0xff]
    %v182 = vld [vmem:[#allocation5 + $0x1c0] sm:$0xff]
    %v183 = vld [vmem:[#allocation5 + $0x1c8] sm:$0xff]
    %v184 = vld [vmem:[#allocation5 + $0x1d0] sm:$0xff]
    %v185 = vld [vmem:[#allocation5 + $0x1d8] sm:$0xff]
    %v186 = vld [vmem:[#allocation5 + $0x1e0] sm:$0xff]
    %v187 = vld [vmem:[#allocation5 + $0x1e8] sm:$0xff]
    %v188 = vld [vmem:[#allocation5 + $0x1f0] sm:$0xff]
    %v189 = vld [vmem:[#allocation5 + $0x1f8] sm:$0xff]
    %v190 = vld [vmem:[#allocation7 + $0x3] sm:$0x1]
    %v191 = vperm.slane %v190, 0
    %192 = vmatpush.msra.mxu0 %v189
    %193 = vmatpush.msra.mxu0 %v188
    %194 = vmatpush.msra.mxu0 %v187
    %195 = vmatpush.msra.mxu0 %v186
    %196 = vmatpush.msra.mxu0 %v185
    %197 = vmatpush.msra.mxu0 %v184
    %198 = vmatpush.msra.mxu0 %v183
    %199 = vmatpush.msra.mxu0 %v182
    %200 = vmatpush.msra.mxu0 %v181
    %201 = vmatpush.msra.mxu0 %v180
    %202 = vmatpush.msra.mxu0 %v179
    %203 = vmatpush.msra.mxu0 %v178
    %204 = vmatpush.msra.mxu0 %v177
    %205 = vmatpush.msra.mxu0 %v176
    %206 = vmatpush.msra.mxu0 %v175
    %207 = vmatpush.msra.mxu0 %v174
    %208 = vmatmul.f32.gmra.mxu0 %v173
    %v209 = vpop.f32.mrf.mxu0
    %v210 = vadd.f32 %v191, %v209
    %211 = vdwg.mxu0
    %vm212 = vcmask 64512
    %213 = vst.msk [vmem:[#allocation8] sm:$0xff] %vm212, %v210
    // Predicated region
    $region26: #{tpu_custom_call.1} parent=1 // pred_check
      _
    $region27: #{tpu_custom_call.1} parent=1 // pred_check_branch
      %215 = sbr.rel (0) target = $region29
    $region28: #{tpu_custom_call.1} parent=1 // pred_region
      %217 = vsyncadd [#allocation4], 0
      %s219 = sshll.u32 [#allocation8], 4
      %s220 = int_to_ptr.vmem [resolvable:$true] %s219
      %s221 = sshll.u32 %s3, 4
      %s222 = int_to_ptr.hbm [resolvable:$true] %s221
      %224 = dma.vmem_to_hbm [thread:$0]  %s220, 128, %s222, [#allocation4]
    $region29: #{tpu_custom_call.1} parent=1 // pred_fallthru
      _
    // Predicated region
    $region30: #{tpu_custom_call.1} parent=1 // pred_check
      _
    $region31: #{tpu_custom_call.1} parent=1 // pred_check_branch
      %226 = sbr.rel (0) target = $region33
    $region32: #{tpu_custom_call.1} parent=1 // pred_region
      %228 = dma.done [#allocation4], 128
    $region33: #{tpu_custom_call.1} parent=1 // pred_fallthru
      _
    %229 = vsyncpa [#allocation3], 1
    %230 = vsyncpa [#allocation6], 1
    %231 = vsyncpa [#allocation4], 1

</llo_original>
